<compile_context>
chip_gen: v6e
topology: v6e:2x2x1
jax: 0.10.0
libtpu: 0.0.40
codegen_flags: <defaults>
</compile_context>

<pallas_src>
import functools

import jax
import jax.numpy as jnp
from jax.experimental import pallas as pl
from jax.experimental.pallas import tpu as pltpu


# ---------------------------------------------------------------------------
# Tiling / VMEM heuristics
# ---------------------------------------------------------------------------

_MAX_BLOCK_ROWS = 2048
# Every (R, 1) ref pads to 128 lanes in VMEM: budget ~8 f32 columns per row
# (up to 6 scratch accumulators + double-buffered label/out columns).
_COL_OVERHEAD_BYTES = 8 * 128 * 4


def _round_up(a: int, b: int) -> int:
    return -(-a // b) * b


@functools.lru_cache()
def _vmem_params():
    """(stream budget bytes, vmem_limit_bytes) — generation aware, v7x-safe."""
    cap = 64 * 1024 * 1024                      # conservative default (v7x/TC)
    try:
        info = pltpu.get_tpu_info()
        cap = int(getattr(info, "vmem_capacity_bytes", cap)) or cap
    except Exception:
        pass
    budget = min(cap // 3, 28 * 1024 * 1024)    # cap keeps v7x (64 MiB) safe
    limit = min((cap * 3) // 4, 2 * budget + (8 << 20))
    return budget, limit


@functools.lru_cache()
def _min_grid_steps():
    """Keep >=8 row blocks only when there are 2 TensorCores to shard over."""
    try:
        info = pltpu.get_tpu_info()
        for name in ("num_cores", "core_count", "num_tensorcores",
                     "tensorcores_per_chip"):
            v = getattr(info, name, None)
            if v:
                return 8 if int(v) >= 2 else 2
    except Exception:
        pass
    return 4


def _row_align_for(dtypes) -> int:
    # f32/int32 -> 8 sublanes, bf16 -> 16, int8/fp8 -> 32
    return max(8 * (4 // jnp.dtype(dt).itemsize) for dt in dtypes)


def _rows_for_block_c(n, block_c, stream_bytes, row_align, budget):
    # stream_bytes: bytes/element summed over the (rows, block_c) streams,
    # x2 for double-buffering; plus the lane-padded (R, 1) columns.
    per_row = 2 * block_c * stream_bytes + _COL_OVERHEAD_BYTES
    rows = budget // per_row
    rows = min(rows, _MAX_BLOCK_ROWS)
    rows = min(rows, _round_up(pl.cdiv(n, _min_grid_steps()), row_align))
    return max(row_align, (rows // row_align) * row_align)


def _choose_tiles(n, c, *, stream_bytes, row_align, budget):
    """Pick (block_rows, block_c).  Class tiling kicks in when a full-C block
    would force tiny row blocks; the last class chunk may be partial (masked
    in-kernel), so C need not be a multiple of block_c."""
    rows = _rows_for_block_c(n, c, stream_bytes, row_align, budget)
    if rows < 256 and c > 512:
        min_rows = min(256, _round_up(n, row_align))
        for cand in (4096, 2048, 1024, 512, 256, 128):
            if cand < c:
                cand_rows = _rows_for_block_c(n, cand, stream_bytes,
                                              row_align, budget)
                if cand_rows >= min_rows:
                    return cand_rows, cand
    return rows, c


# ---------------------------------------------------------------------------
# Hard-label kernel (integer labels, optional analytic label smoothing).
# Grid = (row_blocks, class_blocks); class axis = online-logsumexp reduction.
#   loss = (1-eps)*(lse - x[label]) + eps*lse - (eps/C)*sum_c(x)
# ---------------------------------------------------------------------------

def _ce_hard_kernel(x_ref, lab_ref, o_ref, m_sc, l_sc, g_sc, sx_sc, *,
                    epsilon: float, class_num: int, block_c: int,
                    mask_classes: bool):
    kc = pl.program_id(1)

    @pl.when(kc == 0)
    def _():
        m_sc[...] = jnp.full_like(m_sc, -jnp.inf)
        l_sc[...] = jnp.zeros_like(l_sc)
        g_sc[...] = jnp.zeros_like(g_sc)
        sx_sc[...] = jnp.zeros_like(sx_sc)

    x = x_ref[...].astype(jnp.float32)            # (R, BC)
    lab = lab_ref[...]                            # (R, 1) int32
    r, bc = x.shape

    # Chunk-invariant lane iota; shift the (R,1) label instead of adding
    # kc*block_c to the whole tile (saves a full-tile integer add per chunk).
    cls = jax.lax.broadcasted_iota(jnp.int32, (r, bc), 1)
    lab_local = lab - kc * block_c

    if mask_classes:
        valid = cls < (class_num - kc * block_c)  # scalar rhs per chunk
        x_neg = jnp.where(valid, x, -jnp.inf)
        x_zero = jnp.where(valid, x, 0.0)
    else:
        x_neg = x
        x_zero = x

    # Online logsumexp over the class chunks.
    m_prev = m_sc[...]
    m_new = jnp.maximum(m_prev, jnp.max(x_neg, axis=-1, keepdims=True))
    alpha = jnp.exp(m_prev - m_new)
    l_sc[...] = alpha * l_sc[...] + jnp.sum(jnp.exp(x_neg - m_new),
                                            axis=-1, keepdims=True)
    m_sc[...] = m_new

    # Gather x[row, label[row]] — the label lands in exactly one class chunk.
    g_sc[...] += jnp.sum(jnp.where(cls == lab_local, x_zero, 0.0),
                         axis=-1, keepdims=True)
    if epsilon:
        sx_sc[...] += jnp.sum(x_zero, axis=-1, keepdims=True)

    @pl.when(kc == pl.num_programs(1) - 1)
    def _():
        lse = m_sc[...] + jnp.log(l_sc[...])
        loss = (1.0 - epsilon) * (lse - g_sc[...])
        if epsilon:
            loss = loss + epsilon * lse - (epsilon / class_num) * sx_sc[...]
        o_ref[...] = loss


def _hard_ce_pallas(x2d, labels, *, epsilon: float,
                    block_rows=None, block_c=None):
    """x2d: (N, C) logits, labels: (N,) int class ids. Returns (N,) f32 loss."""
    n, c = x2d.shape
    budget, vmem_limit = _vmem_params()
    x_bytes = jnp.dtype(x2d.dtype).itemsize
    row_align = _row_align_for([x2d.dtype, jnp.int32, jnp.float32])

    if block_c is None:
        auto_rows, block_c = _choose_tiles(n, c, stream_bytes=x_bytes,
                                           row_align=row_align, budget=budget)
    else:
        auto_rows = _rows_for_block_c(n, block_c, x_bytes, row_align, budget)
    assert block_c == c or block_c % 128 == 0
    if block_rows is None:
        block_rows = auto_rows

    # Only the tiny label vector is padded (so its blocks stay in-bounds);
    # the big logits rely on Pallas boundary-block handling + out[:n] slicing.
    labels = labels.astype(jnp.int32).reshape(-1)
    n_lab = _round_up(n, block_rows)
    if n_lab != n:
        labels = jnp.pad(labels, (0, n_lab - n))
    labels2d = labels.reshape(n_lab, 1)

    grid = (pl.cdiv(n, block_rows), pl.cdiv(c, block_c))
    mask_classes = (c % block_c) != 0

    out = pl.pallas_call(
        functools.partial(_ce_hard_kernel, epsilon=float(epsilon),
                          class_num=c, block_c=block_c,
                          mask_classes=mask_classes),
        out_shape=jax.ShapeDtypeStruct((n, 1), jnp.float32),
        grid_spec=pltpu.PrefetchScalarGridSpec(
            num_scalar_prefetch=0,
            grid=grid,
            in_specs=[
                pl.BlockSpec((block_rows, block_c), lambda i, k: (i, k)),
                pl.BlockSpec((block_rows, 1), lambda i, k: (i, 0)),
            ],
            out_specs=pl.BlockSpec((block_rows, 1), lambda i, k: (i, 0)),
            scratch_shapes=[
                pltpu.VMEM((block_rows, 1), jnp.float32),   # running max
                pltpu.VMEM((block_rows, 1), jnp.float32),   # running sum-exp
                pltpu.VMEM((block_rows, 1), jnp.float32),   # gathered x[label]
                pltpu.VMEM((block_rows, 1), jnp.float32),   # running sum(x)
            ],
        ),
        compiler_params=pltpu.CompilerParams(
            dimension_semantics=("parallel", "arbitrary"),
            vmem_limit_bytes=vmem_limit),
    )(x2d, labels2d)
    return out[:, 0]


# ---------------------------------------------------------------------------
# Dense soft-target kernel (class-tiled, online accumulation).
#   non-softmax:  loss = lse_x * sum_c(t_s) - sum_c(t_s * x),
#                 t_s = t*(1-eps) + eps/C (eps optional)
#   softmax:      t_norm = exp(t - lse_t);  loss = lse_x - sum_c(t_norm * x)
#                 with lse_t and sum_c(exp(t-m_t)*x) accumulated online.
# ---------------------------------------------------------------------------

def _ce_soft_kernel(x_ref, t_ref, o_ref,
                    mx_sc, lx_sc, st_sc, sxt_sc, mt_sc, lt_sc, *,
                    softmax_label: bool, epsilon, class_num: int,
                    block_c: int, mask_classes: bool):
    kc = pl.program_id(1)

    @pl.when(kc == 0)
    def _():
        mx_sc[...] = jnp.full_like(mx_sc, -jnp.inf)
        lx_sc[...] = jnp.zeros_like(lx_sc)
        st_sc[...] = jnp.zeros_like(st_sc)
        sxt_sc[...] = jnp.zeros_like(sxt_sc)
        if softmax_label:
            mt_sc[...] = jnp.full_like(mt_sc, -jnp.inf)
            lt_sc[...] = jnp.zeros_like(lt_sc)

    x = x_ref[...].astype(jnp.float32)            # (R, BC)
    t = t_ref[...].astype(jnp.float32)            # (R, BC), native dtype stream
    r, bc = x.shape

    if mask_classes:
        cls = jax.lax.broadcasted_iota(jnp.int32, (r, bc), 1)
        valid = cls < (class_num - kc * block_c)
        x_neg = jnp.where(valid, x, -jnp.inf)
        x_zero = jnp.where(valid, x, 0.0)
        t_zero = jnp.where(valid, t, 0.0)
        t_neg = jnp.where(valid, t, -jnp.inf)
    else:
        valid = None
        x_neg = x
        x_zero = x
        t_zero = t
        t_neg = t

    # Online logsumexp of x.
    m_prev = mx_sc[...]
    m_new = jnp.maximum(m_prev, jnp.max(x_neg, axis=-1, keepdims=True))
    lx_sc[...] = (jnp.exp(m_prev - m_new) * lx_sc[...]
                  + jnp.sum(jnp.exp(x_neg - m_new), axis=-1, keepdims=True))
    mx_sc[...] = m_new

    if softmax_label:
        # Online accumulation of sum exp(t-m_t) and sum exp(t-m_t)*x.
        mt_prev = mt_sc[...]
        mt_new = jnp.maximum(mt_prev, jnp.max(t_neg, axis=-1, keepdims=True))
        beta = jnp.exp(mt_prev - mt_new)
        p = jnp.exp(t_neg - mt_new)
        lt_sc[...] = beta * lt_sc[...] + jnp.sum(p, axis=-1, keepdims=True)
        sxt_sc[...] = beta * sxt_sc[...] + jnp.sum(p * x_zero,
                                                   axis=-1, keepdims=True)
        mt_sc[...] = mt_new
    else:
        if epsilon is not None:
            t_s = t_zero * (1.0 - epsilon)
            if mask_classes:
                t_s = t_s + jnp.where(valid, epsilon / class_num, 0.0)
            else:
                t_s = t_s + epsilon / class_num
        else:
            t_s = t_zero
        st_sc[...] += jnp.sum(t_s, axis=-1, keepdims=True)
        sxt_sc[...] += jnp.sum(t_s * x_zero, axis=-1, keepdims=True)

    @pl.when(kc == pl.num_programs(1) - 1)
    def _():
        lse = mx_sc[...] + jnp.log(lx_sc[...])
        if softmax_label:
            # Exact divide (one per row): sum(t_norm*x) = sxt / lt.
            o_ref[...] = lse - sxt_sc[...] / lt_sc[...]
        else:
            o_ref[...] = lse * st_sc[...] - sxt_sc[...]


def _soft_ce_pallas(x2d, target2d, *, softmax_label: bool, epsilon,
                    block_rows=None, block_c=None):
    """x2d: (N, C) logits, target2d: (N, C) soft targets. Returns (N,) f32."""
    n, c = x2d.shape
    budget, vmem_limit = _vmem_params()
    stream_bytes = (jnp.dtype(x2d.dtype).itemsize
                    + jnp.dtype(target2d.dtype).itemsize)
    row_align = _row_align_for([x2d.dtype, target2d.dtype, jnp.float32])

    if block_c is None:
        auto_rows, block_c = _choose_tiles(n, c, stream_bytes=stream_bytes,
                                           row_align=row_align, budget=budget)
    else:
        auto_rows = _rows_for_block_c(n, block_c, stream_bytes, row_align,
                                      budget)
    assert block_c == c or block_c % 128 == 0
    if block_rows is None:
        block_rows = auto_rows

    grid = (pl.cdiv(n, block_rows), pl.cdiv(c, block_c))
    mask_classes = (c % block_c) != 0

    out = pl.pallas_call(
        functools.partial(_ce_soft_kernel, softmax_label=softmax_label,
                          epsilon=epsilon, class_num=c, block_c=block_c,
                          mask_classes=mask_classes),
        out_shape=jax.ShapeDtypeStruct((n, 1), jnp.float32),
        grid_spec=pltpu.PrefetchScalarGridSpec(
            num_scalar_prefetch=0,
            grid=grid,
            in_specs=[
                pl.BlockSpec((block_rows, block_c), lambda i, k: (i, k)),
                pl.BlockSpec((block_rows, block_c), lambda i, k: (i, k)),
            ],
            out_specs=pl.BlockSpec((block_rows, 1), lambda i, k: (i, 0)),
            scratch_shapes=[pltpu.VMEM((block_rows, 1), jnp.float32)
                            for _ in range(6)],
        ),
        compiler_params=pltpu.CompilerParams(
            dimension_semantics=("parallel", "arbitrary"),
            vmem_limit_bytes=vmem_limit),
    )(x2d, target2d)
    return out[:, 0]


# ---------------------------------------------------------------------------
# Module wrapper (semantics of the PyTorch/Paddle CELoss)
# ---------------------------------------------------------------------------

class CELoss:
    def __init__(self, epsilon=None):
        if epsilon is not None and (epsilon <= 0 or epsilon >= 1):
            epsilon = None
        self.epsilon = epsilon

    def __call__(self, x, label):
        class_num = x.shape[-1]
        x2d = x.reshape(-1, class_num)

        if self.epsilon is not None:
            # per-sample loss (no reduction): sum(-log_softmax(x) * smoothed)
            if label.ndim > 0 and label.shape[-1] == class_num:
                return _soft_ce_pallas(x2d, label.reshape(-1, class_num),
                                       softmax_label=False,
                                       epsilon=self.epsilon)
            # integer labels: analytic label smoothing, no dense one-hot
            # TODO(synk): no ignore_index / out-of-range label handling
            # (matches the original module).
            return _hard_ce_pallas(x2d, label.reshape(-1),
                                   epsilon=self.epsilon)
        else:
            if label.ndim > 0 and label.shape[-1] == class_num:
                loss = _soft_ce_pallas(x2d, label.reshape(-1, class_num),
                                       softmax_label=True, epsilon=None)
            else:
                loss = _hard_ce_pallas(x2d, label.reshape(-1), epsilon=0.0)
            # cross_entropy default reduction = mean
            return jnp.mean(loss)


# ---------------------------------------------------------------------------
# Pure-JAX reference + demo
# ---------------------------------------------------------------------------

def _reference(x, label, epsilon):
    c = x.shape[-1]
    x2d = x.reshape(-1, c).astype(jnp.float32)
    logp = jax.nn.log_softmax(x2d, axis=-1)
    if epsilon is not None:
        oh = jax.nn.one_hot(label.reshape(-1), c, dtype=jnp.float32)
        soft = oh * (1.0 - epsilon) + epsilon / c
        return jnp.sum(-logp * soft, axis=-1)
    if label.ndim > 0 and label.shape[-1] == c:
        t = jax.nn.softmax(label.reshape(-1, c).astype(jnp.float32), axis=-1)
    else:
        t = jax.nn.one_hot(label.reshape(-1), c, dtype=jnp.float32)
    return jnp.mean(jnp.sum(-logp * t, axis=-1))


if __name__ == "__main__":
    key = jax.random.PRNGKey(0)
    k1, k2, k3, k4, k5, k6 = jax.random.split(key, 6)

    N, C = 16, 32
    x = jax.random.normal(k1, (N, C), dtype=jnp.float32)
    hard_label = jax.random.randint(k2, (N,), 0, C, dtype=jnp.int32)
    soft_logits_label = jax.random.normal(k3, (N, C), dtype=jnp.float32)

    # Path 1: label smoothing (epsilon set), integer labels -> per-sample loss
    ce_smooth = CELoss(epsilon=0.1)
    loss_smooth = jax.block_until_ready(ce_smooth(x, hard_label))
    ref_smooth = _reference(x, hard_label, 0.1)
    assert loss_smooth.shape == (N,)
    assert jnp.allclose(loss_smooth, ref_smooth, atol=1e-4, rtol=1e-4)

    # Path 2: epsilon=None, hard integer labels -> scalar mean CE
    ce_plain = CELoss(epsilon=None)
    loss_hard = jax.block_until_ready(ce_plain(x, hard_label))
    ref_hard = _reference(x, hard_label, None)
    assert jnp.allclose(loss_hard, ref_hard, atol=1e-4, rtol=1e-4)

    # Path 3: epsilon=None, soft labels (in-kernel target softmax, native f32)
    loss_soft = jax.block_until_ready(ce_plain(x, soft_logits_label))
    ref_soft = _reference(x, soft_logits_label, None)
    assert jnp.allclose(loss_soft, ref_soft, atol=1e-3, rtol=1e-3)

    # Path 4: hard path with boundary row block (N % block_rows != 0) and a
    # masked final class chunk (C % block_c != 0).
    N2, C2 = 13, 200
    x2 = jax.random.normal(k4, (N2, C2), dtype=jnp.float32)
    hard_label2 = jax.random.randint(k5, (N2,), 0, C2, dtype=jnp.int32)
    loss_tiled = jax.block_until_ready(
        _hard_ce_pallas(x2, hard_label2, epsilon=0.0, block_c=128))
    ref_tiled = jnp.sum(
        -jax.nn.log_softmax(x2.astype(jnp.float32), axis=-1)
        * jax.nn.one_hot(hard_label2, C2, dtype=jnp.float32), axis=-1)
    assert loss_tiled.shape == (N2,)
    assert jnp.allclose(loss_tiled, ref_tiled, atol=1e-4, rtol=1e-4)

    # Path 5: class-tiled soft path with in-kernel target softmax (online
    # target logsumexp) + boundary row block + masked class chunk.
    soft2 = jax.random.normal(k6, (N2, C2), dtype=jnp.float32)
    loss_soft_tiled = jax.block_until_ready(
        _soft_ce_pallas(x2, soft2, softmax_label=True, epsilon=None,
                        block_c=128))
    ref_soft_tiled = jnp.sum(
        -jax.nn.log_softmax(x2.astype(jnp.float32), axis=-1)
        * jax.nn.softmax(soft2.astype(jnp.float32), axis=-1), axis=-1)
    assert loss_soft_tiled.shape == (N2,)
    assert jnp.allclose(loss_soft_tiled, ref_soft_tiled, atol=1e-3, rtol=1e-3)

    print("KERNEL_OK")
</pallas_src>

<mosaic_0001>
module attributes {stable_mosaic.version = 11 : i64} {
  func.func @_ce_hard_kernel(%arg0: i32, %arg1: i32, %arg2: memref<8x32xf32, #tpu.memory_space<vmem>>, %arg3: memref<8x1xi32, #tpu.memory_space<vmem>>, %arg4: memref<8x1xf32, #tpu.memory_space<vmem>>, %arg5: memref<8x1xf32, #tpu.memory_space<vmem>>, %arg6: memref<8x1xf32, #tpu.memory_space<vmem>>, %arg7: memref<8x1xf32, #tpu.memory_space<vmem>>, %arg8: memref<8x1xf32, #tpu.memory_space<vmem>>) attributes {dimension_semantics = [#tpu.dimension_semantics<parallel>, #tpu.dimension_semantics<arbitrary>], iteration_bounds = array<i64: 2, 1>, scalar_prefetch = 0 : i64, scratch_operands = 4 : i64, tpu.core_type = #tpu.core_type<tc>, window_params = [{transform_indices = @transform_0, window_bounds = array<i64: 8, 32>}, {transform_indices = @transform_1, window_bounds = array<i64: 8, 1>}, {transform_indices = @transform_2, window_bounds = array<i64: 8, 1>}]} {
    %c0_i32 = arith.constant 0 : i32
    %0 = arith.cmpi eq, %arg1, %c0_i32 : i32
    %1 = arith.extui %0 : i1 to i32
    %c0_i32_0 = arith.constant 0 : i32
    %2 = arith.cmpi ne, %1, %c0_i32_0 : i32
    scf.if %2 {
      %cst_26 = arith.constant 0xFF800000 : f32
      %42 = vector.broadcast %cst_26 : f32 to vector<8x1xf32>
      %c0_27 = arith.constant 0 : index
      %c0_28 = arith.constant 0 : index
      %43 = vector.load %arg5[%c0_27, %c0_28] : memref<8x1xf32, #tpu.memory_space<vmem>>, vector<8x1xf32>
      tpu.vector_store %arg5[%c0_27, %c0_28], %42 {strides = array<i32>} : memref<8x1xf32, #tpu.memory_space<vmem>>, vector<8x1xf32>,
      %cst_29 = arith.constant 0.000000e+00 : f32
      %44 = vector.broadcast %cst_29 : f32 to vector<8x1xf32>
      %c0_30 = arith.constant 0 : index
      %c0_31 = arith.constant 0 : index
      %45 = vector.load %arg6[%c0_30, %c0_31] : memref<8x1xf32, #tpu.memory_space<vmem>>, vector<8x1xf32>
      tpu.vector_store %arg6[%c0_30, %c0_31], %44 {strides = array<i32>} : memref<8x1xf32, #tpu.memory_space<vmem>>, vector<8x1xf32>,
      %cst_32 = arith.constant 0.000000e+00 : f32
      %46 = vector.broadcast %cst_32 : f32 to vector<8x1xf32>
      %c0_33 = arith.constant 0 : index
      %c0_34 = arith.constant 0 : index
      %47 = vector.load %arg7[%c0_33, %c0_34] : memref<8x1xf32, #tpu.memory_space<vmem>>, vector<8x1xf32>
      tpu.vector_store %arg7[%c0_33, %c0_34], %46 {strides = array<i32>} : memref<8x1xf32, #tpu.memory_space<vmem>>, vector<8x1xf32>,
      %cst_35 = arith.constant 0.000000e+00 : f32
      %48 = vector.broadcast %cst_35 : f32 to vector<8x1xf32>
      %c0_36 = arith.constant 0 : index
      %c0_37 = arith.constant 0 : index
      %49 = vector.load %arg8[%c0_36, %c0_37] : memref<8x1xf32, #tpu.memory_space<vmem>>, vector<8x1xf32>
      tpu.vector_store %arg8[%c0_36, %c0_37], %48 {strides = array<i32>} : memref<8x1xf32, #tpu.memory_space<vmem>>, vector<8x1xf32>,
    } else {
    }
    %c0 = arith.constant 0 : index
    %c0_1 = arith.constant 0 : index
    %3 = vector.load %arg2[%c0, %c0_1] : memref<8x32xf32, #tpu.memory_space<vmem>>, vector<8x32xf32>
    %c0_2 = arith.constant 0 : index
    %c0_3 = arith.constant 0 : index
    %4 = vector.load %arg3[%c0_2, %c0_3] : memref<8x1xi32, #tpu.memory_space<vmem>>, vector<8x1xi32>
    %5 = tpu.iota {dimensions = array<i32: 1>} : vector<8x32xi32>
    %c32_i32 = arith.constant 32 : i32
    %6 = arith.muli %arg1, %c32_i32 : i32
    %7 = vector.broadcast %6 : i32 to vector<8x1xi32>
    %8 = arith.subi %4, %7 : vector<8x1xi32>
    %c0_4 = arith.constant 0 : index
    %c0_5 = arith.constant 0 : index
    %9 = vector.load %arg5[%c0_4, %c0_5] : memref<8x1xf32, #tpu.memory_space<vmem>>, vector<8x1xf32>
    %cst = arith.constant dense<0xFF800000> : vector<8xf32>
    %10 = vector.multi_reduction <maximumf>, %3, %cst [1] : vector<8x32xf32> to vector<8xf32>
    %11 = vector.shape_cast %10 : vector<8xf32> to vector<8x1xf32>
    %12 = arith.maximumf %9, %11 : vector<8x1xf32>
    %13 = arith.subf %9, %12 : vector<8x1xf32>
    %14 = math.exp %13 : vector<8x1xf32>
    %c0_6 = arith.constant 0 : index
    %c0_7 = arith.constant 0 : index
    %15 = vector.load %arg6[%c0_6, %c0_7] : memref<8x1xf32, #tpu.memory_space<vmem>>, vector<8x1xf32>
    %16 = arith.mulf %14, %15 : vector<8x1xf32>
    %17 = vector.broadcast %12 : vector<8x1xf32> to vector<8x32xf32>
    %18 = arith.subf %3, %17 : vector<8x32xf32>
    %19 = math.exp %18 : vector<8x32xf32>
    %cst_8 = arith.constant dense<0.000000e+00> : vector<8xf32>
    %20 = vector.multi_reduction <add>, %19, %cst_8 [1] : vector<8x32xf32> to vector<8xf32>
    %21 = vector.shape_cast %20 : vector<8xf32> to vector<8x1xf32>
    %22 = arith.addf %16, %21 : vector<8x1xf32>
    %c0_9 = arith.constant 0 : index
    %c0_10 = arith.constant 0 : index
    %23 = vector.load %arg6[%c0_9, %c0_10] : memref<8x1xf32, #tpu.memory_space<vmem>>, vector<8x1xf32>
    tpu.vector_store %arg6[%c0_9, %c0_10], %22 {strides = array<i32>} : memref<8x1xf32, #tpu.memory_space<vmem>>, vector<8x1xf32>,
    %c0_11 = arith.constant 0 : index
    %c0_12 = arith.constant 0 : index
    %24 = vector.load %arg5[%c0_11, %c0_12] : memref<8x1xf32, #tpu.memory_space<vmem>>, vector<8x1xf32>
    tpu.vector_store %arg5[%c0_11, %c0_12], %12 {strides = array<i32>} : memref<8x1xf32, #tpu.memory_space<vmem>>, vector<8x1xf32>,
    %c0_13 = arith.constant 0 : index
    %c0_14 = arith.constant 0 : index
    %25 = vector.load %arg7[%c0_13, %c0_14] : memref<8x1xf32, #tpu.memory_space<vmem>>, vector<8x1xf32>
    %26 = vector.broadcast %8 : vector<8x1xi32> to vector<8x32xi32>
    %27 = arith.cmpi eq, %5, %26 : vector<8x32xi32>
    %cst_15 = arith.constant 0.000000e+00 : f32
    %28 = vector.broadcast %cst_15 : f32 to vector<8x32xf32>
    %29 = arith.select %27, %3, %28 : vector<8x32xi1>, vector<8x32xf32>
    %cst_16 = arith.constant dense<0.000000e+00> : vector<8xf32>
    %30 = vector.multi_reduction <add>, %29, %cst_16 [1] : vector<8x32xf32> to vector<8xf32>
    %31 = vector.shape_cast %30 : vector<8xf32> to vector<8x1xf32>
    %32 = arith.addf %25, %31 : vector<8x1xf32>
    %c0_17 = arith.constant 0 : index
    %c0_18 = arith.constant 0 : index
    %33 = vector.load %arg7[%c0_17, %c0_18] : memref<8x1xf32, #tpu.memory_space<vmem>>, vector<8x1xf32>
    tpu.vector_store %arg7[%c0_17, %c0_18], %32 {strides = array<i32>} : memref<8x1xf32, #tpu.memory_space<vmem>>, vector<8x1xf32>,
    %c0_19 = arith.constant 0 : index
    %c0_20 = arith.constant 0 : index
    %34 = vector.load %arg8[%c0_19, %c0_20] : memref<8x1xf32, #tpu.memory_space<vmem>>, vector<8x1xf32>
    %cst_21 = arith.constant dense<0.000000e+00> : vector<8xf32>
    %35 = vector.multi_reduction <add>, %3, %cst_21 [1] : vector<8x32xf32> to vector<8xf32>
    %36 = vector.shape_cast %35 : vector<8xf32> to vector<8x1xf32>
    %37 = arith.addf %34, %36 : vector<8x1xf32>
    %c0_22 = arith.constant 0 : index
    %c0_23 = arith.constant 0 : index
    %38 = vector.load %arg8[%c0_22, %c0_23] : memref<8x1xf32, #tpu.memory_space<vmem>>, vector<8x1xf32>
    tpu.vector_store %arg8[%c0_22, %c0_23], %37 {strides = array<i32>} : memref<8x1xf32, #tpu.memory_space<vmem>>, vector<8x1xf32>,
    %c0_i32_24 = arith.constant 0 : i32
    %39 = arith.cmpi eq, %arg1, %c0_i32_24 : i32
    %40 = arith.extui %39 : i1 to i32
    %c0_i32_25 = arith.constant 0 : i32
    %41 = arith.cmpi ne, %40, %c0_i32_25 : i32
    scf.if %41 {
      %c0_26 = arith.constant 0 : index
      %c0_27 = arith.constant 0 : index
      %42 = vector.load %arg5[%c0_26, %c0_27] : memref<8x1xf32, #tpu.memory_space<vmem>>, vector<8x1xf32>
      %c0_28 = arith.constant 0 : index
      %c0_29 = arith.constant 0 : index
      %43 = vector.load %arg6[%c0_28, %c0_29] : memref<8x1xf32, #tpu.memory_space<vmem>>, vector<8x1xf32>
      %44 = math.log %43 : vector<8x1xf32>
      %45 = arith.addf %42, %44 : vector<8x1xf32>
      %c0_30 = arith.constant 0 : index
      %c0_31 = arith.constant 0 : index
      %46 = vector.load %arg7[%c0_30, %c0_31] : memref<8x1xf32, #tpu.memory_space<vmem>>, vector<8x1xf32>
      %47 = arith.subf %45, %46 : vector<8x1xf32>
      %cst_32 = arith.constant 0.899999976 : f32
      %48 = vector.broadcast %cst_32 : f32 to vector<8x1xf32>
      %49 = arith.mulf %48, %47 : vector<8x1xf32>
      %cst_33 = arith.constant 1.000000e-01 : f32
      %50 = vector.broadcast %cst_33 : f32 to vector<8x1xf32>
      %51 = arith.mulf %50, %45 : vector<8x1xf32>
      %52 = arith.addf %49, %51 : vector<8x1xf32>
      %c0_34 = arith.constant 0 : index
      %c0_35 = arith.constant 0 : index
      %53 = vector.load %arg8[%c0_34, %c0_35] : memref<8x1xf32, #tpu.memory_space<vmem>>, vector<8x1xf32>
      %cst_36 = arith.constant 3.125000e-03 : f32
      %54 = vector.broadcast %cst_36 : f32 to vector<8x1xf32>
      %55 = arith.mulf %54, %53 : vector<8x1xf32>
      %56 = arith.subf %52, %55 : vector<8x1xf32>
      %c0_37 = arith.constant 0 : index
      %c0_38 = arith.constant 0 : index
      %57 = vector.load %arg4[%c0_37, %c0_38] : memref<8x1xf32, #tpu.memory_space<vmem>>, vector<8x1xf32>
      tpu.vector_store %arg4[%c0_37, %c0_38], %56 {strides = array<i32>} : memref<8x1xf32, #tpu.memory_space<vmem>>, vector<8x1xf32>,
    } else {
    }
    return
  }
  func.func @transform_0(%arg0: i32, %arg1: i32) -> (i32, i32) {
    %c0_i32 = arith.constant 0 : i32
    return %arg0, %arg1 : i32, i32
  }
  func.func @transform_1(%arg0: i32, %arg1: i32) -> (i32, i32) {
    %c0_i32 = arith.constant 0 : i32
    %c0_i32_0 = arith.constant 0 : i32
    return %arg0, %c0_i32 : i32, i32
  }
  func.func @transform_2(%arg0: i32, %arg1: i32) -> (i32, i32) {
    %c0_i32 = arith.constant 0 : i32
    %c0_i32_0 = arith.constant 0 : i32
    return %arg0, %c0_i32 : i32, i32
  }
}

</mosaic_0001>

<llo_original>
// kernel: tpu_custom_call.1
$region0: #{tpu_custom_call.1}
  #allocation0 [shape = 'u32[]', space=smem, size = 0x4, offset = 0x4, fixed_abs, tag = 'smem constant byte address 0x4 - core index']
  #allocation1 [shape = 'u32[144,128]{1,0:T(1,128)}', space=vmem, size = 0x12000, scoped, tag = 'internal scratch']
  #allocation2 [shape = 'f32[8,1]{1,0:T(8,128)}', space=vmem, size = 0x1000, scoped, tag = 'scratch operand']
  #allocation3 [shape = 'f32[8,1]{1,0:T(8,128)}', space=vmem, size = 0x1000, scoped, tag = 'scratch operand']
  #allocation4 [shape = 'f32[8,1]{1,0:T(8,128)}', space=vmem, size = 0x1000, scoped, tag = 'scratch operand']
  #allocation5 [shape = 'f32[8,1]{1,0:T(8,128)}', space=vmem, size = 0x1000, scoped, tag = 'scratch operand']
  %s0 = inlined_call_operand.vmem [shape: f32[16,32], index: 0, kind: input, shape index: {}]
  %s1 = inlined_call_operand.vmem [shape: s32[16,1], index: 1, kind: input, shape index: {}]
  %s2 = inlined_call_operand.vmem [shape: f32[16,1], index: 2, kind: output, shape index: {}]
  %s3 = sld [smem:[#allocation0]]
  $region49: #{tpu_custom_call.1} parent=0
    _
  %s5 = ssub.s32 1, %s3
  %s6 = scalar_select 0, %s5, %s3
  loop: start=0, step=1, limit=4
  $region2: #{tpu_custom_call.1} parent=0 // loop_pre_header
    _
  $region3: #{tpu_custom_call.1} parent=0 // loop_header
    %s8 = sphi 0, %s12
    %p9 = scmp.ge.s32.totalorder %s8, 4
    %s15 = sphi 0, %s27
    %s16 = sphi 0, %s23
    %s17 = sphi 0, %s15
    %s18 = sphi 0, %s16
    %s19 = sphi 0, %s17
    %s20 = sphi 0, %s18
    %s32 = sphi 0, %s34
    %s35 = sphi 0, %s32
    %s36 = sphi 0, %s35
    %s52 = sphi 0, %s36
    %s58 = sphi 0, %s60
    %s61 = sphi 0, %s58
    %s62 = sphi 0, %s61
    %s78 = sphi 0, %s62
    %s84 = sphi 0, %s86
    %s87 = sphi 0, %s84
    %s88 = sphi 0, %s87
    %s104 = sphi 0, %s88
  $region4: #{tpu_custom_call.1} parent=0 // loop_header_branch
    %11 = sbr.rel (%p9) target = $region8
  $region5: #{tpu_custom_call.1} parent=0 // loop_body
    %s13 = ssub.s32 %s8, 1
    %s14 = ssub.s32 %s8, 2
    %s21 = sadd.s32 1, %s16
    %p22 = scmp.ge.s32.totalorder %s21, 1
    %s23 = scalar_select %p22, 0, %s21
    %s24 = sadd.s32 1, %s15
    %s25 = scalar_select %p22, %s24, %s15
    %p26 = scmp.ge.s32.totalorder %s25, 2
    %s27 = scalar_select %p26, 0, %s25
    %s28 = ssub.s32 %s15, %s27
    %s29 = ssub.s32 %s16, %s23
    %s30 = sor.u32 %s28, %s29
    %p31 = scmp.eq.s32.totalorder %s30, 0
    %s33 = sadd.s32 %s32, 1
    %s34 = scalar_select %p31, %s32, %s33
    %p37 = pneg %p31
    %p38 = scmp.eq.s32.totalorder %s8, 1
    %p39 = por %p37, %p38
    %p40 = scmp.ne.s32.totalorder %s32, %s35
    %p41 = scmp.eq.s32.totalorder %s8, 0
    %p42 = por %p40, %p41
    %p43 = scmp.ne.s32.totalorder %s32, %s35
    %p44 = scmp.eq.s32.totalorder %s13, 1
    %p45 = por %p43, %p44
    %p46 = scmp.ne.s32.totalorder %s35, %s36
    %p47 = scmp.eq.s32.totalorder %s13, 0
    %p48 = por %p46, %p47
    %p49 = scmp.ne.s32.totalorder %s35, %s36
    %p50 = scmp.eq.s32.totalorder %s14, 1
    %p51 = por %p49, %p50
    %p53 = scmp.ne.s32.totalorder %s36, %s52
    %p54 = scmp.eq.s32.totalorder %s14, 0
    %p55 = por %p53, %p54
    %s56 = ssub.s32 %s15, %s27
    %p57 = scmp.eq.s32.totalorder %s56, 0
    %s59 = sadd.s32 %s58, 1
    %s60 = scalar_select %p57, %s58, %s59
    %p63 = pneg %p57
    %p64 = scmp.eq.s32.totalorder %s8, 1
    %p65 = por %p63, %p64
    %p66 = scmp.ne.s32.totalorder %s58, %s61
    %p67 = scmp.eq.s32.totalorder %s8, 0
    %p68 = por %p66, %p67
    %p69 = scmp.ne.s32.totalorder %s58, %s61
    %p70 = scmp.eq.s32.totalorder %s13, 1
    %p71 = por %p69, %p70
    %p72 = scmp.ne.s32.totalorder %s61, %s62
    %p73 = scmp.eq.s32.totalorder %s13, 0
    %p74 = por %p72, %p73
    %p75 = scmp.ne.s32.totalorder %s61, %s62
    %p76 = scmp.eq.s32.totalorder %s14, 1
    %p77 = por %p75, %p76
    %p79 = scmp.ne.s32.totalorder %s62, %s78
    %p80 = scmp.eq.s32.totalorder %s14, 0
    %p81 = por %p79, %p80
    %s82 = ssub.s32 %s15, %s27
    %p83 = scmp.eq.s32.totalorder %s82, 0
    %s85 = sadd.s32 %s84, 1
    %s86 = scalar_select %p83, %s84, %s85
    %p89 = pneg %p83
    %p90 = scmp.eq.s32.totalorder %s8, 1
    %p91 = por %p89, %p90
    %p92 = scmp.ne.s32.totalorder %s84, %s87
    %p93 = scmp.eq.s32.totalorder %s8, 0
    %p94 = por %p92, %p93
    %p95 = scmp.ne.s32.totalorder %s84, %s87
    %p96 = scmp.eq.s32.totalorder %s13, 1
    %p97 = por %p95, %p96
    %p98 = scmp.ne.s32.totalorder %s87, %s88
    %p99 = scmp.eq.s32.totalorder %s13, 0
    %p100 = por %p98, %p99
    %p101 = scmp.ne.s32.totalorder %s87, %s88
    %p102 = scmp.eq.s32.totalorder %s14, 1
    %p103 = por %p101, %p102
    %p105 = scmp.ne.s32.totalorder %s88, %s104
    %p106 = scmp.eq.s32.totalorder %s14, 0
    %p107 = por %p105, %p106
    %p108 = scmp.le.s32.totalorder 1, %s8
    %p109 = scmp.lt.s32.totalorder %s8, 3
    %p110 = pnand %p108, %p109
    %p111 = pneg %p110
    // Predicated region
    $region9: #{tpu_custom_call.1} parent=5 // pred_check
      _
    $region10: #{tpu_custom_call.1} parent=5 // pred_check_branch
      %113 = sbr.rel (%p110) target = $region12
    $region11: #{tpu_custom_call.1} parent=5 // pred_region
      %s114 = ssub.s32 %s8, 1
    $region12: #{tpu_custom_call.1} parent=5 // pred_fallthru
      _
    %p115 = scmp.lt.s32.totalorder %s8, 2
    // Predicated region
    $region13: #{tpu_custom_call.1} parent=5 // pred_check
      %p116 = pneg %p115
    $region14: #{tpu_custom_call.1} parent=5 // pred_check_branch
      %118 = sbr.rel (%p116) target = $region16
    $region15: #{tpu_custom_call.1} parent=5 // pred_region
      // Predicated region
      $region17: #{tpu_custom_call.1} parent=15 // pred_check
        %p119 = pneg %p42
      $region18: #{tpu_custom_call.1} parent=15 // pred_check_branch
        %121 = sbr.rel (%p119) target = $region20
      $region19: #{tpu_custom_call.1} parent=15 // pred_region
        %p122 = scmp.lt.s32.totalorder %s15, 1
        %s123 = scalar_select %p122, %s15, 1
        %p124 = scmp.lt.s32.totalorder %s16, 0
        %s125 = scalar_select %p124, %s16, 0
        %s126 = sadd.s32 %s125, %s123
        %s127 = smul.addr %s126, 8
        %s128 = scalar_lea.vmem %s0, %s127
      $region20: #{tpu_custom_call.1} parent=15 // pred_fallthru
        _
      // Predicated region
      $region21: #{tpu_custom_call.1} parent=15 // pred_check
        %p129 = pneg %p68
      $region22: #{tpu_custom_call.1} parent=15 // pred_check_branch
        %131 = sbr.rel (%p129) target = $region24
      $region23: #{tpu_custom_call.1} parent=15 // pred_region
        %p132 = scmp.lt.s32.totalorder %s15, 1
        %s133 = scalar_select %p132, %s15, 1
        %s134 = smul.addr %s133, 8
        %s135 = scalar_lea.vmem %s1, %s134
      $region24: #{tpu_custom_call.1} parent=15 // pred_fallthru
        _
    $region16: #{tpu_custom_call.1} parent=5 // pred_fallthru
      _
    %p136 = scmp.le.s32.totalorder 1, %s8
    %p137 = scmp.lt.s32.totalorder %s8, 3
    %p138 = pnand %p136, %p137
    %p139 = pneg %p138
    // Predicated region
    $region25: #{tpu_custom_call.1} parent=5 // pred_check
      _
    $region26: #{tpu_custom_call.1} parent=5 // pred_check_branch
      %141 = sbr.rel (%p138) target = $region28
    $region27: #{tpu_custom_call.1} parent=5 // pred_region
      %s142 = ssub.s32 %s8, 1
      %p143 = scmp.lt.s32.totalorder %s17, 1
      %s144 = scalar_select %p143, %s17, 1
      %p145 = scmp.lt.s32.totalorder %s18, 0
      %s146 = scalar_select %p145, %s18, 0
      %s147 = sadd.s32 %s146, %s144
      %s148 = smul.addr %s147, 8
      %s149 = scalar_lea.vmem %s0, %s148
      %p150 = pneg %p48
      %p151 = pneg %p45
      %p152 = scmp.lt.s32.totalorder %s17, 1
      %s153 = scalar_select %p152, %s17, 1
      %s154 = smul.addr %s153, 8
      %s155 = scalar_lea.vmem %s1, %s154
      %p156 = pneg %p74
      %p157 = pneg %p71
      %p158 = pneg %p100
      %p159 = pneg %p97
      %p160 = scmp.lt.s32.totalorder %s17, 1
      %s161 = scalar_select %p160, %s17, 1
      %s162 = smul.addr %s161, 8
      %s163 = scalar_lea.vmem %s2, %s162
      %p164 = scmp.lt.s32.totalorder %s17, 1
      %s165 = scalar_select %p164, %s17, 1
      %p166 = scmp.lt.s32.totalorder %s18, 0
      %s167 = scalar_select %p166, %s18, 0
      %s168 = sadd.s32 %s167, %s165
      %s169 = smul.addr %s168, 8
      %s170 = scalar_lea.vmem %s0, %s169
      %p171 = scmp.lt.s32.totalorder %s17, 1
      %s172 = scalar_select %p171, %s17, 1
      %s173 = smul.addr %s172, 8
      %s174 = scalar_lea.vmem %s1, %s173
      %p175 = scmp.lt.s32.totalorder %s17, 1
      %s176 = scalar_select %p175, %s17, 1
      %s177 = smul.addr %s176, 8
      %s178 = scalar_lea.vmem %s2, %s177
      %p179 = scmp.eq.s32.totalorder %s18, 0
      // Predicated region
      $region29: #{tpu_custom_call.1} parent=27 // pred_check
        %p180 = pneg %p179
      $region30: #{tpu_custom_call.1} parent=27 // pred_check_branch
        %182 = sbr.rel (%p180) target = $region32
      $region31: #{tpu_custom_call.1} parent=27 // pred_region
        %vm183 = vcmask 7168
        %184 = vst.msk [vmem:[#allocation2] sm:$0xff] %vm183, -inf
        %185 = vst.msk [vmem:[#allocation3] sm:$0xff] %vm183, 0.0
        %186 = vst.msk [vmem:[#allocation4] sm:$0xff] %vm183, 0.0
        %187 = vst.msk [vmem:[#allocation5] sm:$0xff] %vm183, 0.0
      $region32: #{tpu_custom_call.1} parent=27 // pred_fallthru
        _
      %v188 = vld [vmem:[%s170] sm:$0xff]
      %v189 = vld [vmem:[%s174] sm:$0xff]
      %v190 = vlaneseq
      %v191 = vand.u32 %v190, 127
      %s192 = smul.u32 %s18, 32
      %v193 = vstv %s192
      %v194 = vsub.s32 %v189, %v193
      %v195 = vld [vmem:[#allocation2] sm:$0xff]
      %vm196 = vcmask 261120
      %v197 = vsel %vm196, %v188, -inf
      %198 = vmax.xlane.f32.xlu0 %v197
      %v199 = vpop.xlane.xlu0 %198
      %v200 = vmax.f32 %v195, %v199
      %v201 = vsub.f32 %v195, %v200
      %v202 = vmul.f32 %v201, 1.442695
      %v203 = vpow.pop %v202
      %v204 = vld [vmem:[#allocation3] sm:$0xff]
      %v205 = vmul.f32 %v203, %v204
      %207 = vset.pattern.permute.xlu0 0
      %208 = vperm.xlu0 %207, %v200
      %v209 = vpop.permute.xlu0 %208
      %v211 = vsub.f32 %v188, %v209
      %v212 = vmul.f32 %v211, 1.442695
      %v213 = vpow.pop %v212
      %v214 = vsel %vm196, %v213, 0.0
      %215 = vadd.xlane.f32.xlu0 %v214
      %v216 = vpop.xlane.xlu0 %215
      %v217 = vadd.f32 %v205, %v216
      %vm218 = vcmask 7168
      %219 = vst.msk [vmem:[#allocation3] sm:$0xff] %vm218, %v217
      %220 = vst.msk [vmem:[#allocation2] sm:$0xff] %vm218, %v200
      %v221 = vld [vmem:[#allocation4] sm:$0xff]
      %222 = vset.pattern.permute.xlu0 0
      %223 = vperm.xlu0 %222, %v194
      %v224 = vpop.permute.xlu0 %223
      %vm225 = vcmp.eq.s32.totalorder %v191, %v224
      %v226 = vsel %vm225, %v188, 0.0
      %v227 = vsel %vm196, %v226, 0.0
      %228 = vadd.xlane.f32.xlu0 %v227
      %v229 = vpop.xlane.xlu0 %228
      %v230 = vadd.f32 %v221, %v229
      %231 = vst.msk [vmem:[#allocation4] sm:$0xff] %vm218, %v230
      %v232 = vld [vmem:[#allocation5] sm:$0xff]
      %v233 = vsel %vm196, %v188, 0.0
      %234 = vadd.xlane.f32.xlu0 %v233
      %v235 = vpop.xlane.xlu0 %234
      %v236 = vadd.f32 %v232, %v235
      %237 = vst.msk [vmem:[#allocation5] sm:$0xff] %vm218, %v236
      // Predicated region
      $region33: #{tpu_custom_call.1} parent=27 // pred_check
        %p238 = pneg %p179
      $region34: #{tpu_custom_call.1} parent=27 // pred_check_branch
        %240 = sbr.rel (%p238) target = $region36
      $region35: #{tpu_custom_call.1} parent=27 // pred_region
        %v241 = vld [vmem:[#allocation2] sm:$0xff]
        %v242 = vld [vmem:[#allocation3] sm:$0xff]
        %v243 = vlog2.pop %v242
        %v244 = vmul.f32 %v243, 0.6931472
        %v245 = vadd.f32 %v241, %v244
        %v246 = vld [vmem:[#allocation4] sm:$0xff]
        %v247 = vsub.f32 %v245, %v246
        %v248 = vmul.f32 %v247, 0.9
        %v249 = vmul.f32 %v245, 0.1
        %v250 = vadd.f32 %v248, %v249
        %v251 = vld [vmem:[#allocation5] sm:$0xff]
        %v252 = vmul.f32 %v251, 0.003125
        %v253 = vsub.f32 %v250, %v252
        %254 = vst.msk [vmem:[%s178] sm:$0xff] %vm218, %v253
      $region36: #{tpu_custom_call.1} parent=27 // pred_fallthru
        _
      %p255 = scmp.lt.s32.totalorder %s17, 1
      %s256 = scalar_select %p255, %s17, 1
      %s257 = smul.addr %s256, 8
      %s258 = scalar_lea.vmem %s2, %s257
      // Predicated region
      $region37: #{tpu_custom_call.1} parent=27 // pred_check
        %p259 = pneg %p97
      $region38: #{tpu_custom_call.1} parent=27 // pred_check_branch
        %261 = sbr.rel (%p259) target = $region40
      $region39: #{tpu_custom_call.1} parent=27 // pred_region
        _
      $region40: #{tpu_custom_call.1} parent=27 // pred_fallthru
        _
    $region28: #{tpu_custom_call.1} parent=5 // pred_fallthru
      _
    %p262 = scmp.le.s32.totalorder 2, %s8
    // Predicated region
    $region41: #{tpu_custom_call.1} parent=5 // pred_check
      %p263 = pneg %p262
    $region42: #{tpu_custom_call.1} parent=5 // pred_check_branch
      %265 = sbr.rel (%p263) target = $region44
    $region43: #{tpu_custom_call.1} parent=5 // pred_region
      %s266 = ssub.s32 %s8, 2
      // Predicated region
      $region45: #{tpu_custom_call.1} parent=43 // pred_check
        %p267 = pneg %p103
      $region46: #{tpu_custom_call.1} parent=43 // pred_check_branch
        %269 = sbr.rel (%p267) target = $region48
      $region47: #{tpu_custom_call.1} parent=43 // pred_region
        %p270 = scmp.lt.s32.totalorder %s19, 1
        %s271 = scalar_select %p270, %s19, 1
        %s272 = smul.addr %s271, 8
        %s273 = scalar_lea.vmem %s2, %s272
      $region48: #{tpu_custom_call.1} parent=43 // pred_fallthru
        _
    $region44: #{tpu_custom_call.1} parent=5 // pred_fallthru
      _
  $region6: #{tpu_custom_call.1} parent=0 // loop_footer
    %s12 = sadd.s32 1, %s8
  $region7: #{tpu_custom_call.1} parent=0 // loop_footer_branch
    %7 = sbr.rel target = $region3
  $region8: #{tpu_custom_call.1} parent=0 // loop_exit
    _

</llo_original>
